<compile_context>
chip_gen: v5e
topology: v5e:2x2
jax: 0.10.0
libtpu: 0.0.40
codegen_flags: <defaults>
</compile_context>

<pallas_src>
import functools

import jax
import jax.numpy as jnp
from jax import lax
from jax.experimental import pallas as pl
from jax.experimental.pallas import tpu as pltpu


def _round_up(x, m):
    return -(-x // m) * m


# ------------------------------ Pallas kernel ---------------------------------
def _lstm_dir_chunk_kernel(xw_ref, whh_ref, out_ref, h_scr, c_scr, *,
                           hidden_pad, chunk, num_chunks, seq_len,
                           matmul_dtype, inner_unroll):
    """One (direction, time-chunk) grid step of the LSTM recurrence.

    Grid = (num_directions, num_chunks):
      axis 0 ("parallel"):  direction; on multi-TensorCore chips (v7x) the two
                            directions are sharded across the two cores.
      axis 1 ("arbitrary"): time chunks, sequential; carries live in scratch.

    xw_ref : (chunk, b_pad, 4*Hp)  pre-projected x@W_ih + b for this chunk.
    whh_ref: (Hp, 4*Hp)            hidden->gate weights (matmul_dtype).
    out_ref: (chunk, b_pad, Hp)    hidden states for this chunk (f32).
    h_scr, c_scr: (b_pad, Hp)      f32 carries persisting across time chunks.
    """
    d = pl.program_id(0)   # 0 = forward, 1 = backward
    t = pl.program_id(1)   # chunk step (always ascending)

    @pl.when(t == 0)
    def _():
        h_scr[...] = jnp.zeros_like(h_scr)
        c_scr[...] = jnp.zeros_like(c_scr)

    whh = whh_ref[...]
    Hp = hidden_pad
    # The BlockSpec already hands the backward direction its chunks in reverse
    # time order; the same arithmetic recovers the global step for masking.
    time_block = (1 - d) * t + d * (num_chunks - 1 - t)
    base = time_block * chunk
    has_time_padding = (chunk * num_chunks) != seq_len

    def cell(s, h, c):
        # Forward walks its chunk ascending, backward descending.
        s_eff = (1 - d) * s + d * (chunk - 1 - s)
        # Elementwise math stays f32 (v5e VPU/EUP have no bf16); cast to
        # matmul_dtype only right at the MXU dot, accumulate in f32.
        gates = xw_ref[s_eff].astype(jnp.float32) + jnp.dot(
            h.astype(matmul_dtype), whh, preferred_element_type=jnp.float32)
        i_g = jax.nn.sigmoid(gates[:, 0 * Hp:1 * Hp])
        f_g = jax.nn.sigmoid(gates[:, 1 * Hp:2 * Hp])
        g_g = jnp.tanh(gates[:, 2 * Hp:3 * Hp])
        o_g = jax.nn.sigmoid(gates[:, 3 * Hp:4 * Hp])
        c_new = f_g * c + i_g * g_g
        h_new = o_g * jnp.tanh(c_new)
        if has_time_padding:
            # Padded time steps leave the carries untouched, so the backward
            # direction (which meets the padding first) stays correct.
            valid = (base + s_eff) < seq_len
            h_new = jnp.where(valid, h_new, h)
            c_new = jnp.where(valid, c_new, c)
        out_ref[s_eff] = h_new.astype(out_ref.dtype)
        return h_new, c_new

    def outer(o, carry):
        h, c = carry
        for u in range(inner_unroll):                 # short static unroll keeps
            h, c = cell(o * inner_unroll + u, h, c)   # LLO visibility w/o spills
        return h, c

    h, c = lax.fori_loop(0, chunk // inner_unroll, outer,
                         (h_scr[...], c_scr[...]))
    h_scr[...] = h
    c_scr[...] = c


# ------------------------------ host wrapper -----------------------------------
def _pick_chunk(seq_len, b_pad, h_pad, xw_bytes, w_bytes, *,
                budget_bytes, cap, inner_unroll):
    """Largest time chunk whose per-core resident VMEM fits the budget."""
    g_pad = 4 * h_pad
    # Double-buffered W_hh (constant index_map still gets 2 buffers) + carries.
    fixed = 2 * h_pad * g_pad * w_bytes + 2 * b_pad * h_pad * 4
    # Double-buffered xw input block + f32 output block, per time step.
    per_step = 2 * b_pad * (g_pad * xw_bytes + h_pad * 4)
    avail = max(budget_bytes - fixed, per_step)
    chunk = int(max(1, min(cap, seq_len, avail // per_step)))
    unroll = max(1, min(inner_unroll, chunk))
    chunk = (chunk // unroll) * unroll
    est = fixed + per_step * chunk
    return chunk, unroll, est


def bert_lstm_forward(batch, params, *, hidden_size, bidirectional,
                      matmul_dtype=jnp.bfloat16, xw_dtype=jnp.bfloat16,
                      chunk_cap=64, inner_unroll=4,
                      vmem_block_budget_bytes=24 << 20,
                      projection_precision=None):
    """Equivalent of BertLSTM.forward: (B, T, D_in) -> (B, T, H * num_dirs)."""
    B, T, D = batch.shape
    H = hidden_size
    nd = 2 if bidirectional else 1

    # Lane/sublane alignment: pad H (and each 4H gate slab) to a multiple of
    # 128 and batch to a multiple of 8 so every gate slice and per-step store is
    # a dense (8,128) vreg tile (BERT-scale H=768 needs no padding).
    h_pad = _round_up(H, 128)
    g_pad = 4 * h_pad
    b_pad = _round_up(max(B, 8), 8)
    # TODO(synk): stack several sequences up to b_pad=32-128 when the workload
    # allows, to better fill the 256-wide MXU per recurrence step.

    if bidirectional:
        wih = jnp.stack([params["wih_f"], params["wih_b"]])      # (nd, D, 4H)
        whh = jnp.stack([params["whh_f"], params["whh_b"]])      # (nd, H, 4H)
        bias = jnp.stack([params["b_f"], params["b_b"]])         # (nd, 4H)
    else:
        wih, whh, bias = (params["wih_f"][None], params["whh_f"][None],
                          params["b_f"][None])

    def pad_gate_cols(x):                      # (..., 4H) -> (..., 4*h_pad)
        if h_pad == H:
            return x
        lead = x.shape[:-1]
        x = x.reshape(*lead, 4, H)
        x = jnp.pad(x, [(0, 0)] * len(lead) + [(0, 0), (0, h_pad - H)])
        return x.reshape(*lead, 4 * h_pad)

    wih = pad_gate_cols(wih)                                     # (nd, D, Gp)
    bias = pad_gate_cols(bias)                                   # (nd, Gp)
    whh = pad_gate_cols(jnp.pad(whh, ((0, 0), (0, h_pad - H), (0, 0))))
    whh = whh.astype(matmul_dtype)                               # (nd, Hp, Gp)

    # Hoisted input projection: one big XLA matmul for all steps/directions,
    # emitted directly time-major; stored in xw_dtype (bf16 by default) since it
    # is the biggest HBM stream the recurrent kernel reads.
    if b_pad != B:
        batch = jnp.pad(batch, ((0, b_pad - B), (0, 0), (0, 0)))
    xw = jnp.einsum("btd,ndg->ntbg", batch, wih,
                    precision=projection_precision,
                    preferred_element_type=jnp.float32)
    xw = (xw + bias[:, None, None, :]).astype(xw_dtype)          # (nd, T, b_pad, Gp)

    chunk, unroll, vmem_est = _pick_chunk(
        T, b_pad, h_pad, jnp.dtype(xw_dtype).itemsize,
        jnp.dtype(matmul_dtype).itemsize,
        budget_bytes=vmem_block_budget_bytes, cap=chunk_cap,
        inner_unroll=inner_unroll)

    # Pad T up to a chunk multiple (never degrade to chunk=1 for awkward T);
    # padded steps are masked inside the kernel and sliced off below.
    t_pad = _round_up(T, chunk)
    nc = t_pad // chunk
    if t_pad != T:
        xw = jnp.pad(xw, ((0, 0), (0, t_pad - T), (0, 0), (0, 0)))

    kernel = functools.partial(
        _lstm_dir_chunk_kernel, hidden_pad=h_pad, chunk=chunk, num_chunks=nc,
        seq_len=T, matmul_dtype=matmul_dtype, inner_unroll=unroll)

    time_map = lambda di, ti: (di, (1 - di) * ti + di * (nc - 1 - ti), 0, 0)
    const_map = lambda di, ti: (di, 0, 0)

    out = pl.pallas_call(
        kernel,
        out_shape=jax.ShapeDtypeStruct((nd, t_pad, b_pad, h_pad), jnp.float32),
        grid_spec=pltpu.PrefetchScalarGridSpec(
            num_scalar_prefetch=0,
            grid=(nd, nc),
            in_specs=[
                pl.BlockSpec((None, chunk, b_pad, g_pad), time_map),
                # TODO(synk): pipeline_mode=pl.Buffered(1) on this constant
                # W_hh spec would drop its (useless) second pipeline buffer.
                pl.BlockSpec((None, h_pad, g_pad), const_map),
            ],
            out_specs=pl.BlockSpec((None, chunk, b_pad, h_pad), time_map),
            scratch_shapes=[pltpu.VMEM((b_pad, h_pad), jnp.float32)] * 2,
        ),
        compiler_params=pltpu.CompilerParams(
            # Direction axis is parallel: on v7x the two directions run on the
            # two TensorCores; the time axis carries the recurrence.
            dimension_semantics=("parallel", "arbitrary"),
            vmem_limit_bytes=int(min(max(32 << 20, 2 * vmem_est), 56 << 20)),
        ),
    )(xw, whh)

    # (nd, T, B, H) -> (B, T, nd*H), forward features first (PyTorch layout).
    out = out[:, :T, :B, :H]
    return jnp.transpose(out, (2, 1, 0, 3)).reshape(B, T, nd * H)


# ---------------------- pure-JAX reference (for verification) ------------------
def bert_lstm_ref(batch, params, *, hidden_size, bidirectional,
                  matmul_dtype=jnp.bfloat16, xw_dtype=jnp.bfloat16,
                  projection_precision=None):
    """Independent lax.scan reference mirroring the kernel's numerics."""
    H = hidden_size
    x_tbd = jnp.transpose(batch, (1, 0, 2))
    B = x_tbd.shape[1]

    def run_dir(wih, whh, b, reverse):
        xw = jnp.einsum("tbd,dg->tbg", x_tbd, wih,
                        precision=projection_precision,
                        preferred_element_type=jnp.float32) + b
        xw = xw.astype(xw_dtype).astype(jnp.float32)
        if reverse:
            xw = xw[::-1]
        whh_m = whh.astype(matmul_dtype)

        def step(carry, xw_t):
            h, c = carry
            gates = xw_t + jnp.dot(h.astype(matmul_dtype), whh_m,
                                   preferred_element_type=jnp.float32)
            i_g = jax.nn.sigmoid(gates[:, 0 * H:1 * H])
            f_g = jax.nn.sigmoid(gates[:, 1 * H:2 * H])
            g_g = jnp.tanh(gates[:, 2 * H:3 * H])
            o_g = jax.nn.sigmoid(gates[:, 3 * H:4 * H])
            c = f_g * c + i_g * g_g
            h = o_g * jnp.tanh(c)
            return (h, c), h

        init = (jnp.zeros((B, H), jnp.float32), jnp.zeros((B, H), jnp.float32))
        _, ys = lax.scan(step, init, xw)
        return ys[::-1] if reverse else ys

    outs = [run_dir(params["wih_f"], params["whh_f"], params["b_f"], False)]
    if bidirectional:
        outs.append(run_dir(params["wih_b"], params["whh_b"], params["b_b"], True))
    out = jnp.concatenate(outs, axis=-1)
    return jnp.transpose(out, (1, 0, 2))


# ---------------------- deterministic parameter init ---------------------------
def init_params(key, input_size, hidden_size, bidirectional):
    """PyTorch-style init: U(-1/sqrt(H), 1/sqrt(H)); gate order i, f, g, o."""
    H, Din = hidden_size, input_size
    bound = 1.0 / float(H) ** 0.5

    def uni(k, shape):
        return jax.random.uniform(k, shape, jnp.float32, -bound, bound)

    keys = jax.random.split(key, 8)
    params = {
        "wih_f": uni(keys[0], (4 * H, Din)).T,           # stored (D, 4H)
        "whh_f": uni(keys[1], (4 * H, H)).T,             # stored (H, 4H)
        "b_f": uni(keys[2], (4 * H,)) + uni(keys[3], (4 * H,)),   # b_ih + b_hh
    }
    if bidirectional:
        params.update({
            "wih_b": uni(keys[4], (4 * H, Din)).T,
            "whh_b": uni(keys[5], (4 * H, H)).T,
            "b_b": uni(keys[6], (4 * H,)) + uni(keys[7], (4 * H,)),
        })
    return params


if __name__ == "__main__":
    B, T, INPUT_SIZE, HIDDEN_SIZE = 2, 8, 16, 32
    BIDIRECTIONAL = True

    key = jax.random.PRNGKey(0)
    k_x, k_p = jax.random.split(key)
    batch = jax.random.normal(k_x, (B, T, INPUT_SIZE), jnp.float32)
    params = init_params(k_p, INPUT_SIZE, HIDDEN_SIZE, BIDIRECTIONAL)

    # HIGHEST projection precision only so the comparison with the pure-JAX
    # reference is tight; bf16 recurrent weights / bf16 xw stream are the
    # performance defaults and are mirrored by the reference.
    common = dict(hidden_size=HIDDEN_SIZE, bidirectional=BIDIRECTIONAL,
                  matmul_dtype=jnp.bfloat16, xw_dtype=jnp.bfloat16,
                  projection_precision=lax.Precision.HIGHEST)

    fwd = jax.jit(functools.partial(bert_lstm_forward, **common))
    out = jax.block_until_ready(fwd(batch, params))

    ref = jax.block_until_ready(bert_lstm_ref(batch, params, **common))

    expected_shape = (B, T, HIDDEN_SIZE * (2 if BIDIRECTIONAL else 1))
    assert out.shape == expected_shape, (out.shape, expected_shape)
    max_err = float(jnp.max(jnp.abs(out - ref)))
    assert jnp.allclose(out, ref, atol=5e-3, rtol=5e-3), max_err

    print("KERNEL_OK")
</pallas_src>

<mosaic_0001>
module attributes {stable_mosaic.version = 11 : i64} {
  func.func @_lstm_dir_chunk_kernel(%arg0: i32, %arg1: i32, %arg2: memref<1x8x8x512xbf16, #tpu.memory_space<vmem>>, %arg3: memref<1x128x512xbf16, #tpu.memory_space<vmem>>, %arg4: memref<1x8x8x128xf32, #tpu.memory_space<vmem>>, %arg5: memref<8x128xf32, #tpu.memory_space<vmem>>, %arg6: memref<8x128xf32, #tpu.memory_space<vmem>>) attributes {dimension_semantics = [#tpu.dimension_semantics<parallel>, #tpu.dimension_semantics<arbitrary>], iteration_bounds = array<i64: 2, 1>, scalar_prefetch = 0 : i64, scratch_operands = 2 : i64, tpu.core_type = #tpu.core_type<tc>, window_params = [{transform_indices = @transform_0, window_bounds = array<i64: 1, 8, 8, 512>}, {transform_indices = @transform_1, window_bounds = array<i64: 1, 128, 512>}, {transform_indices = @transform_2, window_bounds = array<i64: 1, 8, 8, 128>}]} {
    %c0_i32 = arith.constant 0 : i32
    %0 = arith.cmpi eq, %arg1, %c0_i32 : i32
    %1 = arith.extui %0 : i1 to i32
    %c0_i32_0 = arith.constant 0 : i32
    %2 = arith.cmpi ne, %1, %c0_i32_0 : i32
    scf.if %2 {
      %cst = arith.constant 0.000000e+00 : f32
      %11 = vector.broadcast %cst : f32 to vector<8x128xf32>
      %c0_13 = arith.constant 0 : index
      %c0_14 = arith.constant 0 : index
      %12 = vector.load %arg5[%c0_13, %c0_14] : memref<8x128xf32, #tpu.memory_space<vmem>>, vector<8x128xf32>
      tpu.vector_store %arg5[%c0_13, %c0_14], %11 {strides = array<i32>} : memref<8x128xf32, #tpu.memory_space<vmem>>, vector<8x128xf32>,
      %cst_15 = arith.constant 0.000000e+00 : f32
      %13 = vector.broadcast %cst_15 : f32 to vector<8x128xf32>
      %c0_16 = arith.constant 0 : index
      %c0_17 = arith.constant 0 : index
      %14 = vector.load %arg6[%c0_16, %c0_17] : memref<8x128xf32, #tpu.memory_space<vmem>>, vector<8x128xf32>
      tpu.vector_store %arg6[%c0_16, %c0_17], %13 {strides = array<i32>} : memref<8x128xf32, #tpu.memory_space<vmem>>, vector<8x128xf32>,
    } else {
    }
    %c0 = arith.constant 0 : index
    %c0_1 = arith.constant 0 : index
    %c0_2 = arith.constant 0 : index
    %3 = vector.load %arg3[%c0, %c0_1, %c0_2] : memref<1x128x512xbf16, #tpu.memory_space<vmem>>, vector<1x128x512xbf16>
    %4 = vector.shape_cast %3 : vector<1x128x512xbf16> to vector<128x512xbf16>
    %c0_3 = arith.constant 0 : index
    %c0_4 = arith.constant 0 : index
    %5 = vector.load %arg5[%c0_3, %c0_4] : memref<8x128xf32, #tpu.memory_space<vmem>>, vector<8x128xf32>
    %c0_5 = arith.constant 0 : index
    %c0_6 = arith.constant 0 : index
    %6 = vector.load %arg6[%c0_5, %c0_6] : memref<8x128xf32, #tpu.memory_space<vmem>>, vector<8x128xf32>
    %c0_i32_7 = arith.constant 0 : i32
    %c2_i32 = arith.constant 2 : i32
    %7 = arith.addi %c0_i32_7, %c2_i32 : i32
    %c1_i32 = arith.constant 1 : i32
    %8:2 = scf.for %arg7 = %c0_i32_7 to %7 step %c1_i32 iter_args(%arg8 = %5, %arg9 = %6) -> (vector<8x128xf32>, vector<8x128xf32>)  : i32 {
      %c4_i32 = arith.constant 4 : i32
      %11 = arith.muli %arg7, %c4_i32 : i32
      %c0_i32_13 = arith.constant 0 : i32
      %12 = arith.addi %11, %c0_i32_13 : i32
      %c1_i32_14 = arith.constant 1 : i32
      %13 = arith.subi %c1_i32_14, %arg0 : i32
      %14 = arith.muli %13, %12 : i32
      %c7_i32 = arith.constant 7 : i32
      %15 = arith.subi %c7_i32, %12 : i32
      %16 = arith.muli %arg0, %15 : i32
      %17 = arith.addi %14, %16 : i32
      %c0_15 = arith.constant 0 : index
      %18 = arith.index_cast %17 : i32 to index
      %c0_16 = arith.constant 0 : index
      %c0_17 = arith.constant 0 : index
      %19 = vector.load %arg2[%c0_15, %18, %c0_16, %c0_17] : memref<1x8x8x512xbf16, #tpu.memory_space<vmem>>, vector<1x1x8x512xbf16>
      %20 = vector.shape_cast %19 : vector<1x1x8x512xbf16> to vector<8x512xbf16>
      %21 = arith.extf %20 : vector<8x512xbf16> to vector<8x512xf32>
      %22 = arith.truncf %arg8 : vector<8x128xf32> to vector<8x128xbf16>
      %cst = arith.constant dense<0.000000e+00> : vector<8x512xf32>
      %23 = tpu.matmul %22, %4, %cst {dimension_numbers = #tpu.dot_dimension_numbers<[1], [0], [0], [1], [0, 0, 1, 1], [], []>} : vector<8x128xbf16>, vector<128x512xbf16>, vector<8x512xf32> -> vector<8x512xf32>
      %24 = arith.addf %21, %23 : vector<8x512xf32>
      %25 = vector.extract_strided_slice %24 {offsets = [0, 0], sizes = [8, 128], strides = [1, 1]} : vector<8x512xf32> to vector<8x128xf32>
      %26 = arith.negf %25 : vector<8x128xf32>
      %27 = math.exp %26 : vector<8x128xf32>
      %cst_18 = arith.constant 1.000000e+00 : f32
      %28 = vector.broadcast %cst_18 : f32 to vector<8x128xf32>
      %29 = arith.addf %28, %27 : vector<8x128xf32>
      %30 = arith.divf %28, %29 : vector<8x128xf32>
      %31 = vector.extract_strided_slice %24 {offsets = [0, 128], sizes = [8, 128], strides = [1, 1]} : vector<8x512xf32> to vector<8x128xf32>
      %32 = arith.negf %31 : vector<8x128xf32>
      %33 = math.exp %32 : vector<8x128xf32>
      %cst_19 = arith.constant 1.000000e+00 : f32
      %34 = vector.broadcast %cst_19 : f32 to vector<8x128xf32>
      %35 = arith.addf %34, %33 : vector<8x128xf32>
      %36 = arith.divf %34, %35 : vector<8x128xf32>
      %37 = vector.extract_strided_slice %24 {offsets = [0, 256], sizes = [8, 128], strides = [1, 1]} : vector<8x512xf32> to vector<8x128xf32>
      %38 = math.tanh %37 : vector<8x128xf32>
      %39 = vector.extract_strided_slice %24 {offsets = [0, 384], sizes = [8, 128], strides = [1, 1]} : vector<8x512xf32> to vector<8x128xf32>
      %40 = arith.negf %39 : vector<8x128xf32>
      %41 = math.exp %40 : vector<8x128xf32>
      %cst_20 = arith.constant 1.000000e+00 : f32
      %42 = vector.broadcast %cst_20 : f32 to vector<8x128xf32>
      %43 = arith.addf %42, %41 : vector<8x128xf32>
      %44 = arith.divf %42, %43 : vector<8x128xf32>
      %45 = arith.mulf %36, %arg9 : vector<8x128xf32>
      %46 = arith.mulf %30, %38 : vector<8x128xf32>
      %47 = arith.addf %45, %46 : vector<8x128xf32>
      %48 = math.tanh %47 : vector<8x128xf32>
      %49 = arith.mulf %44, %48 : vector<8x128xf32>
      %c0_21 = arith.constant 0 : index
      %50 = arith.index_cast %17 : i32 to index
      %c0_22 = arith.constant 0 : index
      %c0_23 = arith.constant 0 : index
      %51 = vector.load %arg4[%c0_21, %50, %c0_22, %c0_23] : memref<1x8x8x128xf32, #tpu.memory_space<vmem>>, vector<1x1x8x128xf32>
      %52 = vector.shape_cast %51 : vector<1x1x8x128xf32> to vector<8x128xf32>
      %53 = vector.shape_cast %49 : vector<8x128xf32> to vector<1x1x8x128xf32>
      tpu.vector_store %arg4[%c0_21, %50, %c0_22, %c0_23], %53 {strides = array<i32>} : memref<1x8x8x128xf32, #tpu.memory_space<vmem>>, vector<1x1x8x128xf32>,
      %c4_i32_24 = arith.constant 4 : i32
      %54 = arith.muli %arg7, %c4_i32_24 : i32
      %c1_i32_25 = arith.constant 1 : i32
      %55 = arith.addi %54, %c1_i32_25 : i32
      %c1_i32_26 = arith.constant 1 : i32
      %56 = arith.subi %c1_i32_26, %arg0 : i32
      %57 = arith.muli %56, %55 : i32
      %c7_i32_27 = arith.constant 7 : i32
      %58 = arith.subi %c7_i32_27, %55 : i32
      %59 = arith.muli %arg0, %58 : i32
      %60 = arith.addi %57, %59 : i32
      %c0_28 = arith.constant 0 : index
      %61 = arith.index_cast %60 : i32 to index
      %c0_29 = arith.constant 0 : index
      %c0_30 = arith.constant 0 : index
      %62 = vector.load %arg2[%c0_28, %61, %c0_29, %c0_30] : memref<1x8x8x512xbf16, #tpu.memory_space<vmem>>, vector<1x1x8x512xbf16>
      %63 = vector.shape_cast %62 : vector<1x1x8x512xbf16> to vector<8x512xbf16>
      %64 = arith.extf %63 : vector<8x512xbf16> to vector<8x512xf32>
      %65 = arith.truncf %49 : vector<8x128xf32> to vector<8x128xbf16>
      %cst_31 = arith.constant dense<0.000000e+00> : vector<8x512xf32>
      %66 = tpu.matmul %65, %4, %cst_31 {dimension_numbers = #tpu.dot_dimension_numbers<[1], [0], [0], [1], [0, 0, 1, 1], [], []>} : vector<8x128xbf16>, vector<128x512xbf16>, vector<8x512xf32> -> vector<8x512xf32>
      %67 = arith.addf %64, %66 : vector<8x512xf32>
      %68 = vector.extract_strided_slice %67 {offsets = [0, 0], sizes = [8, 128], strides = [1, 1]} : vector<8x512xf32> to vector<8x128xf32>
      %69 = arith.negf %68 : vector<8x128xf32>
      %70 = math.exp %69 : vector<8x128xf32>
      %cst_32 = arith.constant 1.000000e+00 : f32
      %71 = vector.broadcast %cst_32 : f32 to vector<8x128xf32>
      %72 = arith.addf %71, %70 : vector<8x128xf32>
      %73 = arith.divf %71, %72 : vector<8x128xf32>
      %74 = vector.extract_strided_slice %67 {offsets = [0, 128], sizes = [8, 128], strides = [1, 1]} : vector<8x512xf32> to vector<8x128xf32>
      %75 = arith.negf %74 : vector<8x128xf32>
      %76 = math.exp %75 : vector<8x128xf32>
      %cst_33 = arith.constant 1.000000e+00 : f32
      %77 = vector.broadcast %cst_33 : f32 to vector<8x128xf32>
      %78 = arith.addf %77, %76 : vector<8x128xf32>
      %79 = arith.divf %77, %78 : vector<8x128xf32>
      %80 = vector.extract_strided_slice %67 {offsets = [0, 256], sizes = [8, 128], strides = [1, 1]} : vector<8x512xf32> to vector<8x128xf32>
      %81 = math.tanh %80 : vector<8x128xf32>
      %82 = vector.extract_strided_slice %67 {offsets = [0, 384], sizes = [8, 128], strides = [1, 1]} : vector<8x512xf32> to vector<8x128xf32>
      %83 = arith.negf %82 : vector<8x128xf32>
      %84 = math.exp %83 : vector<8x128xf32>
      %cst_34 = arith.constant 1.000000e+00 : f32
      %85 = vector.broadcast %cst_34 : f32 to vector<8x128xf32>
      %86 = arith.addf %85, %84 : vector<8x128xf32>
      %87 = arith.divf %85, %86 : vector<8x128xf32>
      %88 = arith.mulf %79, %47 : vector<8x128xf32>
      %89 = arith.mulf %73, %81 : vector<8x128xf32>
      %90 = arith.addf %88, %89 : vector<8x128xf32>
      %91 = math.tanh %90 : vector<8x128xf32>
      %92 = arith.mulf %87, %91 : vector<8x128xf32>
      %c0_35 = arith.constant 0 : index
      %93 = arith.index_cast %60 : i32 to index
      %c0_36 = arith.constant 0 : index
      %c0_37 = arith.constant 0 : index
      %94 = vector.load %arg4[%c0_35, %93, %c0_36, %c0_37] : memref<1x8x8x128xf32, #tpu.memory_space<vmem>>, vector<1x1x8x128xf32>
      %95 = vector.shape_cast %94 : vector<1x1x8x128xf32> to vector<8x128xf32>
      %96 = vector.shape_cast %92 : vector<8x128xf32> to vector<1x1x8x128xf32>
      tpu.vector_store %arg4[%c0_35, %93, %c0_36, %c0_37], %96 {strides = array<i32>} : memref<1x8x8x128xf32, #tpu.memory_space<vmem>>, vector<1x1x8x128xf32>,
      %c4_i32_38 = arith.constant 4 : i32
      %97 = arith.muli %arg7, %c4_i32_38 : i32
      %c2_i32_39 = arith.constant 2 : i32
      %98 = arith.addi %97, %c2_i32_39 : i32
      %c1_i32_40 = arith.constant 1 : i32
      %99 = arith.subi %c1_i32_40, %arg0 : i32
      %100 = arith.muli %99, %98 : i32
      %c7_i32_41 = arith.constant 7 : i32
      %101 = arith.subi %c7_i32_41, %98 : i32
      %102 = arith.muli %arg0, %101 : i32
      %103 = arith.addi %100, %102 : i32
      %c0_42 = arith.constant 0 : index
      %104 = arith.index_cast %103 : i32 to index
      %c0_43 = arith.constant 0 : index
      %c0_44 = arith.constant 0 : index
      %105 = vector.load %arg2[%c0_42, %104, %c0_43, %c0_44] : memref<1x8x8x512xbf16, #tpu.memory_space<vmem>>, vector<1x1x8x512xbf16>
      %106 = vector.shape_cast %105 : vector<1x1x8x512xbf16> to vector<8x512xbf16>
      %107 = arith.extf %106 : vector<8x512xbf16> to vector<8x512xf32>
      %108 = arith.truncf %92 : vector<8x128xf32> to vector<8x128xbf16>
      %cst_45 = arith.constant dense<0.000000e+00> : vector<8x512xf32>
      %109 = tpu.matmul %108, %4, %cst_45 {dimension_numbers = #tpu.dot_dimension_numbers<[1], [0], [0], [1], [0, 0, 1, 1], [], []>} : vector<8x128xbf16>, vector<128x512xbf16>, vector<8x512xf32> -> vector<8x512xf32>
      %110 = arith.addf %107, %109 : vector<8x512xf32>
      %111 = vector.extract_strided_slice %110 {offsets = [0, 0], sizes = [8, 128], strides = [1, 1]} : vector<8x512xf32> to vector<8x128xf32>
      %112 = arith.negf %111 : vector<8x128xf32>
      %113 = math.exp %112 : vector<8x128xf32>
      %cst_46 = arith.constant 1.000000e+00 : f32
      %114 = vector.broadcast %cst_46 : f32 to vector<8x128xf32>
      %115 = arith.addf %114, %113 : vector<8x128xf32>
      %116 = arith.divf %114, %115 : vector<8x128xf32>
      %117 = vector.extract_strided_slice %110 {offsets = [0, 128], sizes = [8, 128], strides = [1, 1]} : vector<8x512xf32> to vector<8x128xf32>
      %118 = arith.negf %117 : vector<8x128xf32>
      %119 = math.exp %118 : vector<8x128xf32>
      %cst_47 = arith.constant 1.000000e+00 : f32
      %120 = vector.broadcast %cst_47 : f32 to vector<8x128xf32>
      %121 = arith.addf %120, %119 : vector<8x128xf32>
      %122 = arith.divf %120, %121 : vector<8x128xf32>
      %123 = vector.extract_strided_slice %110 {offsets = [0, 256], sizes = [8, 128], strides = [1, 1]} : vector<8x512xf32> to vector<8x128xf32>
      %124 = math.tanh %123 : vector<8x128xf32>
      %125 = vector.extract_strided_slice %110 {offsets = [0, 384], sizes = [8, 128], strides = [1, 1]} : vector<8x512xf32> to vector<8x128xf32>
      %126 = arith.negf %125 : vector<8x128xf32>
      %127 = math.exp %126 : vector<8x128xf32>
      %cst_48 = arith.constant 1.000000e+00 : f32
      %128 = vector.broadcast %cst_48 : f32 to vector<8x128xf32>
      %129 = arith.addf %128, %127 : vector<8x128xf32>
      %130 = arith.divf %128, %129 : vector<8x128xf32>
      %131 = arith.mulf %122, %90 : vector<8x128xf32>
      %132 = arith.mulf %116, %124 : vector<8x128xf32>
      %133 = arith.addf %131, %132 : vector<8x128xf32>
      %134 = math.tanh %133 : vector<8x128xf32>
      %135 = arith.mulf %130, %134 : vector<8x128xf32>
      %c0_49 = arith.constant 0 : index
      %136 = arith.index_cast %103 : i32 to index
      %c0_50 = arith.constant 0 : index
      %c0_51 = arith.constant 0 : index
      %137 = vector.load %arg4[%c0_49, %136, %c0_50, %c0_51] : memref<1x8x8x128xf32, #tpu.memory_space<vmem>>, vector<1x1x8x128xf32>
      %138 = vector.shape_cast %137 : vector<1x1x8x128xf32> to vector<8x128xf32>
      %139 = vector.shape_cast %135 : vector<8x128xf32> to vector<1x1x8x128xf32>
      tpu.vector_store %arg4[%c0_49, %136, %c0_50, %c0_51], %139 {strides = array<i32>} : memref<1x8x8x128xf32, #tpu.memory_space<vmem>>, vector<1x1x8x128xf32>,
      %c4_i32_52 = arith.constant 4 : i32
      %140 = arith.muli %arg7, %c4_i32_52 : i32
      %c3_i32 = arith.constant 3 : i32
      %141 = arith.addi %140, %c3_i32 : i32
      %c1_i32_53 = arith.constant 1 : i32
      %142 = arith.subi %c1_i32_53, %arg0 : i32
      %143 = arith.muli %142, %141 : i32
      %c7_i32_54 = arith.constant 7 : i32
      %144 = arith.subi %c7_i32_54, %141 : i32
      %145 = arith.muli %arg0, %144 : i32
      %146 = arith.addi %143, %145 : i32
      %c0_55 = arith.constant 0 : index
      %147 = arith.index_cast %146 : i32 to index
      %c0_56 = arith.constant 0 : index
      %c0_57 = arith.constant 0 : index
      %148 = vector.load %arg2[%c0_55, %147, %c0_56, %c0_57] : memref<1x8x8x512xbf16, #tpu.memory_space<vmem>>, vector<1x1x8x512xbf16>
      %149 = vector.shape_cast %148 : vector<1x1x8x512xbf16> to vector<8x512xbf16>
      %150 = arith.extf %149 : vector<8x512xbf16> to vector<8x512xf32>
      %151 = arith.truncf %135 : vector<8x128xf32> to vector<8x128xbf16>
      %cst_58 = arith.constant dense<0.000000e+00> : vector<8x512xf32>
      %152 = tpu.matmul %151, %4, %cst_58 {dimension_numbers = #tpu.dot_dimension_numbers<[1], [0], [0], [1], [0, 0, 1, 1], [], []>} : vector<8x128xbf16>, vector<128x512xbf16>, vector<8x512xf32> -> vector<8x512xf32>
      %153 = arith.addf %150, %152 : vector<8x512xf32>
      %154 = vector.extract_strided_slice %153 {offsets = [0, 0], sizes = [8, 128], strides = [1, 1]} : vector<8x512xf32> to vector<8x128xf32>
      %155 = arith.negf %154 : vector<8x128xf32>
      %156 = math.exp %155 : vector<8x128xf32>
      %cst_59 = arith.constant 1.000000e+00 : f32
      %157 = vector.broadcast %cst_59 : f32 to vector<8x128xf32>
      %158 = arith.addf %157, %156 : vector<8x128xf32>
      %159 = arith.divf %157, %158 : vector<8x128xf32>
      %160 = vector.extract_strided_slice %153 {offsets = [0, 128], sizes = [8, 128], strides = [1, 1]} : vector<8x512xf32> to vector<8x128xf32>
      %161 = arith.negf %160 : vector<8x128xf32>
      %162 = math.exp %161 : vector<8x128xf32>
      %cst_60 = arith.constant 1.000000e+00 : f32
      %163 = vector.broadcast %cst_60 : f32 to vector<8x128xf32>
      %164 = arith.addf %163, %162 : vector<8x128xf32>
      %165 = arith.divf %163, %164 : vector<8x128xf32>
      %166 = vector.extract_strided_slice %153 {offsets = [0, 256], sizes = [8, 128], strides = [1, 1]} : vector<8x512xf32> to vector<8x128xf32>
      %167 = math.tanh %166 : vector<8x128xf32>
      %168 = vector.extract_strided_slice %153 {offsets = [0, 384], sizes = [8, 128], strides = [1, 1]} : vector<8x512xf32> to vector<8x128xf32>
      %169 = arith.negf %168 : vector<8x128xf32>
      %170 = math.exp %169 : vector<8x128xf32>
      %cst_61 = arith.constant 1.000000e+00 : f32
      %171 = vector.broadcast %cst_61 : f32 to vector<8x128xf32>
      %172 = arith.addf %171, %170 : vector<8x128xf32>
      %173 = arith.divf %171, %172 : vector<8x128xf32>
      %174 = arith.mulf %165, %133 : vector<8x128xf32>
      %175 = arith.mulf %159, %167 : vector<8x128xf32>
      %176 = arith.addf %174, %175 : vector<8x128xf32>
      %177 = math.tanh %176 : vector<8x128xf32>
      %178 = arith.mulf %173, %177 : vector<8x128xf32>
      %c0_62 = arith.constant 0 : index
      %179 = arith.index_cast %146 : i32 to index
      %c0_63 = arith.constant 0 : index
      %c0_64 = arith.constant 0 : index
      %180 = vector.load %arg4[%c0_62, %179, %c0_63, %c0_64] : memref<1x8x8x128xf32, #tpu.memory_space<vmem>>, vector<1x1x8x128xf32>
      %181 = vector.shape_cast %180 : vector<1x1x8x128xf32> to vector<8x128xf32>
      %182 = vector.shape_cast %178 : vector<8x128xf32> to vector<1x1x8x128xf32>
      tpu.vector_store %arg4[%c0_62, %179, %c0_63, %c0_64], %182 {strides = array<i32>} : memref<1x8x8x128xf32, #tpu.memory_space<vmem>>, vector<1x1x8x128xf32>,
      scf.yield %178, %176 : vector<8x128xf32>, vector<8x128xf32>
    }
    %c2_i32_8 = arith.constant 2 : i32
    %c0_9 = arith.constant 0 : index
    %c0_10 = arith.constant 0 : index
    %9 = vector.load %arg5[%c0_9, %c0_10] : memref<8x128xf32, #tpu.memory_space<vmem>>, vector<8x128xf32>
    tpu.vector_store %arg5[%c0_9, %c0_10], %8#0 {strides = array<i32>} : memref<8x128xf32, #tpu.memory_space<vmem>>, vector<8x128xf32>,
    %c0_11 = arith.constant 0 : index
    %c0_12 = arith.constant 0 : index
    %10 = vector.load %arg6[%c0_11, %c0_12] : memref<8x128xf32, #tpu.memory_space<vmem>>, vector<8x128xf32>
    tpu.vector_store %arg6[%c0_11, %c0_12], %8#1 {strides = array<i32>} : memref<8x128xf32, #tpu.memory_space<vmem>>, vector<8x128xf32>,
    return
  }
  func.func @transform_0(%arg0: i32, %arg1: i32) -> (i32, i32, i32, i32) {
    %c1_i32 = arith.constant 1 : i32
    %0 = arith.subi %c1_i32, %arg0 : i32
    %1 = arith.muli %0, %arg1 : i32
    %c0_i32 = arith.constant 0 : i32
    %2 = arith.subi %c0_i32, %arg1 : i32
    %3 = arith.muli %arg0, %2 : i32
    %4 = arith.addi %1, %3 : i32
    %c0_i32_0 = arith.constant 0 : i32
    %c0_i32_1 = arith.constant 0 : i32
    %c0_i32_2 = arith.constant 0 : i32
    return %arg0, %4, %c0_i32_0, %c0_i32_1 : i32, i32, i32, i32
  }
  func.func @transform_1(%arg0: i32, %arg1: i32) -> (i32, i32, i32) {
    %c0_i32 = arith.constant 0 : i32
    %c0_i32_0 = arith.constant 0 : i32
    %c0_i32_1 = arith.constant 0 : i32
    return %arg0, %c0_i32, %c0_i32_0 : i32, i32, i32
  }
  func.func @transform_2(%arg0: i32, %arg1: i32) -> (i32, i32, i32, i32) {
    %c1_i32 = arith.constant 1 : i32
    %0 = arith.subi %c1_i32, %arg0 : i32
    %1 = arith.muli %0, %arg1 : i32
    %c0_i32 = arith.constant 0 : i32
    %2 = arith.subi %c0_i32, %arg1 : i32
    %3 = arith.muli %arg0, %2 : i32
    %4 = arith.addi %1, %3 : i32
    %c0_i32_0 = arith.constant 0 : i32
    %c0_i32_1 = arith.constant 0 : i32
    %c0_i32_2 = arith.constant 0 : i32
    return %arg0, %4, %c0_i32_0, %c0_i32_1 : i32, i32, i32, i32
  }
}

</mosaic_0001>

<llo_original>
// kernel: bert_lstm_forward.1
$region0: #{bert_lstm_forward.1}
  #allocation0 [shape = 'u32[]', space=smem, size = 0x4, offset = 0x4, fixed_abs, tag = 'smem constant byte address 0x4 - core index']
  #allocation1 [shape = 'u32[72,128]{1,0:T(1,128)}', space=vmem, size = 0x9000, scoped, tag = 'internal scratch']
  #allocation2 [shape = 'f32[8,128]{1,0:T(8,128)}', space=vmem, size = 0x1000, scoped, tag = 'scratch operand']
  #allocation3 [shape = 'f32[8,128]{1,0:T(8,128)}', space=vmem, size = 0x1000, scoped, tag = 'scratch operand']
  %s0 = inlined_call_operand.vmem [shape: bf16[2,8,8,512], index: 0, kind: input, shape index: {}]
  %s1 = inlined_call_operand.vmem [shape: bf16[2,128,512], index: 1, kind: input, shape index: {}]
  %s2 = inlined_call_operand.vmem [shape: f32[2,8,8,128], index: 2, kind: output, shape index: {}]
  %s3 = sld [smem:[#allocation0]]
  $region52: #{bert_lstm_forward.1} parent=0
    _
  %s5 = ssub.s32 1, %s3
  %s6 = scalar_select 0, %s5, %s3
  loop: start=0, step=1, limit=4
  $region2: #{bert_lstm_forward.1} parent=0 // loop_pre_header
    _
  $region3: #{bert_lstm_forward.1} parent=0 // loop_header
    %s8 = sphi 0, %s12
    %p9 = scmp.ge.s32.totalorder %s8, 4
    %s15 = sphi 0, %s27
    %s16 = sphi 0, %s23
    %s17 = sphi 0, %s15
    %s18 = sphi 0, %s16
    %s19 = sphi 0, %s17
    %s20 = sphi 0, %s18
    %s42 = sphi 0, %s44
    %s45 = sphi 0, %s42
    %s46 = sphi 0, %s45
    %s62 = sphi 0, %s46
    %s68 = sphi 0, %s70
    %s71 = sphi 0, %s68
    %s72 = sphi 0, %s71
    %s88 = sphi 0, %s72
    %s106 = sphi 0, %s108
    %s109 = sphi 0, %s106
    %s110 = sphi 0, %s109
    %s126 = sphi 0, %s110
  $region4: #{bert_lstm_forward.1} parent=0 // loop_header_branch
    %11 = sbr.rel (%p9) target = $region8
  $region5: #{bert_lstm_forward.1} parent=0 // loop_body
    %s13 = ssub.s32 %s8, 1
    %s14 = ssub.s32 %s8, 2
    %s21 = sadd.s32 1, %s16
    %p22 = scmp.ge.s32.totalorder %s21, 1
    %s23 = scalar_select %p22, 0, %s21
    %s24 = sadd.s32 1, %s15
    %s25 = scalar_select %p22, %s24, %s15
    %p26 = scmp.ge.s32.totalorder %s25, 2
    %s27 = scalar_select %p26, 0, %s25
    %s28 = ssub.s32 1, %s15
    %s29 = smul.u32 %s28, %s16
    %s30 = ssub.s32 0, %s16
    %s31 = smul.u32 %s15, %s30
    %s32 = sadd.s32 %s29, %s31
    %s33 = ssub.s32 1, %s27
    %s34 = smul.u32 %s33, %s23
    %s35 = ssub.s32 0, %s23
    %s36 = smul.u32 %s27, %s35
    %s37 = sadd.s32 %s34, %s36
    %s38 = ssub.s32 %s15, %s27
    %s39 = ssub.s32 %s32, %s37
    %s40 = sor.u32 %s38, %s39
    %p41 = scmp.eq.s32.totalorder %s40, 0
    %s43 = sadd.s32 %s42, 1
    %s44 = scalar_select %p41, %s42, %s43
    %p47 = pneg %p41
    %p48 = scmp.eq.s32.totalorder %s8, 1
    %p49 = por %p47, %p48
    %p50 = scmp.ne.s32.totalorder %s42, %s45
    %p51 = scmp.eq.s32.totalorder %s8, 0
    %p52 = por %p50, %p51
    %p53 = scmp.ne.s32.totalorder %s42, %s45
    %p54 = scmp.eq.s32.totalorder %s13, 1
    %p55 = por %p53, %p54
    %p56 = scmp.ne.s32.totalorder %s45, %s46
    %p57 = scmp.eq.s32.totalorder %s13, 0
    %p58 = por %p56, %p57
    %p59 = scmp.ne.s32.totalorder %s45, %s46
    %p60 = scmp.eq.s32.totalorder %s14, 1
    %p61 = por %p59, %p60
    %p63 = scmp.ne.s32.totalorder %s46, %s62
    %p64 = scmp.eq.s32.totalorder %s14, 0
    %p65 = por %p63, %p64
    %s66 = ssub.s32 %s15, %s27
    %p67 = scmp.eq.s32.totalorder %s66, 0
    %s69 = sadd.s32 %s68, 1
    %s70 = scalar_select %p67, %s68, %s69
    %p73 = pneg %p67
    %p74 = scmp.eq.s32.totalorder %s8, 1
    %p75 = por %p73, %p74
    %p76 = scmp.ne.s32.totalorder %s68, %s71
    %p77 = scmp.eq.s32.totalorder %s8, 0
    %p78 = por %p76, %p77
    %p79 = scmp.ne.s32.totalorder %s68, %s71
    %p80 = scmp.eq.s32.totalorder %s13, 1
    %p81 = por %p79, %p80
    %p82 = scmp.ne.s32.totalorder %s71, %s72
    %p83 = scmp.eq.s32.totalorder %s13, 0
    %p84 = por %p82, %p83
    %p85 = scmp.ne.s32.totalorder %s71, %s72
    %p86 = scmp.eq.s32.totalorder %s14, 1
    %p87 = por %p85, %p86
    %p89 = scmp.ne.s32.totalorder %s72, %s88
    %p90 = scmp.eq.s32.totalorder %s14, 0
    %p91 = por %p89, %p90
    %s92 = ssub.s32 1, %s15
    %s93 = smul.u32 %s92, %s16
    %s94 = ssub.s32 0, %s16
    %s95 = smul.u32 %s15, %s94
    %s96 = sadd.s32 %s93, %s95
    %s97 = ssub.s32 1, %s27
    %s98 = smul.u32 %s97, %s23
    %s99 = ssub.s32 0, %s23
    %s100 = smul.u32 %s27, %s99
    %s101 = sadd.s32 %s98, %s100
    %s102 = ssub.s32 %s15, %s27
    %s103 = ssub.s32 %s96, %s101
    %s104 = sor.u32 %s102, %s103
    %p105 = scmp.eq.s32.totalorder %s104, 0
    %s107 = sadd.s32 %s106, 1
    %s108 = scalar_select %p105, %s106, %s107
    %p111 = pneg %p105
    %p112 = scmp.eq.s32.totalorder %s8, 1
    %p113 = por %p111, %p112
    %p114 = scmp.ne.s32.totalorder %s106, %s109
    %p115 = scmp.eq.s32.totalorder %s8, 0
    %p116 = por %p114, %p115
    %p117 = scmp.ne.s32.totalorder %s106, %s109
    %p118 = scmp.eq.s32.totalorder %s13, 1
    %p119 = por %p117, %p118
    %p120 = scmp.ne.s32.totalorder %s109, %s110
    %p121 = scmp.eq.s32.totalorder %s13, 0
    %p122 = por %p120, %p121
    %p123 = scmp.ne.s32.totalorder %s109, %s110
    %p124 = scmp.eq.s32.totalorder %s14, 1
    %p125 = por %p123, %p124
    %p127 = scmp.ne.s32.totalorder %s110, %s126
    %p128 = scmp.eq.s32.totalorder %s14, 0
    %p129 = por %p127, %p128
    %p130 = scmp.le.s32.totalorder 1, %s8
    %p131 = scmp.lt.s32.totalorder %s8, 3
    %p132 = pnand %p130, %p131
    %p133 = pneg %p132
    // Predicated region
    $region9: #{bert_lstm_forward.1} parent=5 // pred_check
      _
    $region10: #{bert_lstm_forward.1} parent=5 // pred_check_branch
      %135 = sbr.rel (%p132) target = $region12
    $region11: #{bert_lstm_forward.1} parent=5 // pred_region
      %s136 = ssub.s32 %s8, 1
    $region12: #{bert_lstm_forward.1} parent=5 // pred_fallthru
      _
    %p137 = scmp.lt.s32.totalorder %s8, 2
    // Predicated region
    $region13: #{bert_lstm_forward.1} parent=5 // pred_check
      %p138 = pneg %p137
    $region14: #{bert_lstm_forward.1} parent=5 // pred_check_branch
      %140 = sbr.rel (%p138) target = $region16
    $region15: #{bert_lstm_forward.1} parent=5 // pred_region
      // Predicated region
      $region17: #{bert_lstm_forward.1} parent=15 // pred_check
        %p141 = pneg %p52
      $region18: #{bert_lstm_forward.1} parent=15 // pred_check_branch
        %143 = sbr.rel (%p141) target = $region20
      $region19: #{bert_lstm_forward.1} parent=15 // pred_region
        %s144 = ssub.s32 1, %s15
        %s145 = smul.u32 %s144, %s16
        %s146 = ssub.s32 0, %s16
        %s147 = smul.u32 %s15, %s146
        %s148 = sadd.s32 %s145, %s147
        %s149 = smul.u32 8, %s148
        %p150 = scmp.lt.s32.totalorder %s15, 1
        %s151 = scalar_select %p150, %s15, 1
        %p152 = scmp.lt.s32.totalorder %s149, 7
        %s153 = scalar_select %p152, %s149, 7
        %s154 = smul.addr %s153, 4
        %s155 = smul.addr %s151, 32
        %s156 = sadd.s32 %s154, %s155
        %s157 = smul.addr %s156, 4
        %s158 = scalar_lea.vmem %s0, %s157
        %s159 = ssub.s32 1, %s15
        %s160 = smul.u32 %s159, %s16
        %s161 = ssub.s32 0, %s16
        %s162 = smul.u32 %s15, %s161
        %s163 = sadd.s32 %s160, %s162
        %s164 = smul.u32 8, %s163
      $region20: #{bert_lstm_forward.1} parent=15 // pred_fallthru
        _
      // Predicated region
      $region21: #{bert_lstm_forward.1} parent=15 // pred_check
        %p165 = pneg %p78
      $region22: #{bert_lstm_forward.1} parent=15 // pred_check_branch
        %167 = sbr.rel (%p165) target = $region24
      $region23: #{bert_lstm_forward.1} parent=15 // pred_region
        %p168 = scmp.lt.s32.totalorder %s15, 1
        %s169 = scalar_select %p168, %s15, 1
        %s170 = smul.addr %s169, 64
        %s171 = smul.addr %s170, 4
        %s172 = scalar_lea.vmem %s1, %s171
      $region24: #{bert_lstm_forward.1} parent=15 // pred_fallthru
        _
    $region16: #{bert_lstm_forward.1} parent=5 // pred_fallthru
      _
    %p173 = scmp.le.s32.totalorder 1, %s8
    %p174 = scmp.lt.s32.totalorder %s8, 3
    %p175 = pnand %p173, %p174
    %p176 = pneg %p175
    // Predicated region
    $region25: #{bert_lstm_forward.1} parent=5 // pred_check
      _
    $region26: #{bert_lstm_forward.1} parent=5 // pred_check_branch
      %178 = sbr.rel (%p175) target = $region28
    $region27: #{bert_lstm_forward.1} parent=5 // pred_region
      %s179 = ssub.s32 %s8, 1
      %s180 = ssub.s32 1, %s17
      %s181 = smul.u32 %s180, %s18
      %s182 = ssub.s32 0, %s18
      %s183 = smul.u32 %s17, %s182
      %s184 = sadd.s32 %s181, %s183
      %s185 = smul.u32 8, %s184
      %p186 = scmp.lt.s32.totalorder %s17, 1
      %s187 = scalar_select %p186, %s17, 1
      %p188 = scmp.lt.s32.totalorder %s185, 7
      %s189 = scalar_select %p188, %s185, 7
      %s190 = smul.addr %s189, 4
      %s191 = smul.addr %s187, 32
      %s192 = sadd.s32 %s190, %s191
      %s193 = smul.addr %s192, 4
      %s194 = scalar_lea.vmem %s0, %s193
      %p195 = pneg %p58
      %p196 = pneg %p55
      %p197 = scmp.lt.s32.totalorder %s17, 1
      %s198 = scalar_select %p197, %s17, 1
      %s199 = smul.addr %s198, 64
      %s200 = smul.addr %s199, 4
      %s201 = scalar_lea.vmem %s1, %s200
      %p202 = pneg %p84
      %p203 = pneg %p81
      %p204 = pneg %p122
      %p205 = pneg %p119
      %s206 = ssub.s32 1, %s17
      %s207 = smul.u32 %s206, %s18
      %s208 = ssub.s32 0, %s18
      %s209 = smul.u32 %s17, %s208
      %s210 = sadd.s32 %s207, %s209
      %s211 = smul.u32 8, %s210
      %p212 = scmp.lt.s32.totalorder %s17, 1
      %s213 = scalar_select %p212, %s17, 1
      %p214 = scmp.lt.s32.totalorder %s211, 7
      %s215 = scalar_select %p214, %s211, 7
      %s216 = smul.addr %s213, 8
      %s217 = sadd.s32 %s215, %s216
      %s218 = smul.addr %s217, 8
      %s219 = scalar_lea.vmem %s2, %s218
      %s220 = ssub.s32 1, %s17
      %s221 = smul.u32 %s220, %s18
      %s222 = ssub.s32 0, %s18
      %s223 = smul.u32 %s17, %s222
      %s224 = sadd.s32 %s221, %s223
      %s225 = smul.u32 8, %s224
      %p226 = scmp.lt.s32.totalorder %s17, 1
      %s227 = scalar_select %p226, %s17, 1
      %p228 = scmp.lt.s32.totalorder %s225, 7
      %s229 = scalar_select %p228, %s225, 7
      %s230 = smul.addr %s229, 4
      %s231 = smul.addr %s227, 32
      %s232 = sadd.s32 %s230, %s231
      %s233 = smul.addr %s232, 4
      %s234 = scalar_lea.vmem %s0, %s233
      %s235 = ssub.s32 1, %s17
      %s236 = smul.u32 %s235, %s18
      %s237 = ssub.s32 0, %s18
      %s238 = smul.u32 %s17, %s237
      %s239 = sadd.s32 %s236, %s238
      %s240 = smul.u32 8, %s239
      %p241 = scmp.lt.s32.totalorder %s17, 1
      %s242 = scalar_select %p241, %s17, 1
      %s243 = smul.addr %s242, 64
      %s244 = smul.addr %s243, 4
      %s245 = scalar_lea.vmem %s1, %s244
      %s246 = ssub.s32 1, %s17
      %s247 = smul.u32 %s246, %s18
      %s248 = ssub.s32 0, %s18
      %s249 = smul.u32 %s17, %s248
      %s250 = sadd.s32 %s247, %s249
      %s251 = smul.u32 8, %s250
      %p252 = scmp.lt.s32.totalorder %s17, 1
      %s253 = scalar_select %p252, %s17, 1
      %p254 = scmp.lt.s32.totalorder %s251, 7
      %s255 = scalar_select %p254, %s251, 7
      %s256 = smul.addr %s253, 8
      %s257 = sadd.s32 %s255, %s256
      %s258 = smul.addr %s257, 8
      %s259 = scalar_lea.vmem %s2, %s258
      %s260 = ssub.s32 1, %s17
      %s261 = smul.u32 %s260, %s18
      %s262 = ssub.s32 0, %s18
      %s263 = smul.u32 %s17, %s262
      %s264 = sadd.s32 %s261, %s263
      %s265 = smul.u32 8, %s264
      %p266 = scmp.eq.s32.totalorder %s18, 0
      // Predicated region
      $region29: #{bert_lstm_forward.1} parent=27 // pred_check
        %p267 = pneg %p266
      $region30: #{bert_lstm_forward.1} parent=27 // pred_check_branch
        %269 = sbr.rel (%p267) target = $region32
      $region31: #{bert_lstm_forward.1} parent=27 // pred_region
        %270 = vst [vmem:[#allocation2] sm:$0xff] 0.0
        %271 = vst [vmem:[#allocation3] sm:$0xff] 0.0
      $region32: #{bert_lstm_forward.1} parent=27 // pred_fallthru
        _
      %v272 = vld [vmem:[%s245] sm:$0xff]
      %v273 = vld [vmem:[%s245 + $0x8] sm:$0xff]
      %v274 = vld [vmem:[%s245 + $0x10] sm:$0xff]
      %v275 = vld [vmem:[%s245 + $0x18] sm:$0xff]
      %v276 = vld [vmem:[%s245 + $0x20] sm:$0xff]
      %v277 = vld [vmem:[%s245 + $0x28] sm:$0xff]
      %v278 = vld [vmem:[%s245 + $0x30] sm:$0xff]
      %v279 = vld [vmem:[%s245 + $0x38] sm:$0xff]
      %v280 = vld [vmem:[%s245 + $0x40] sm:$0xff]
      %v281 = vld [vmem:[%s245 + $0x48] sm:$0xff]
      %v282 = vld [vmem:[%s245 + $0x50] sm:$0xff]
      %v283 = vld [vmem:[%s245 + $0x58] sm:$0xff]
      %v284 = vld [vmem:[%s245 + $0x60] sm:$0xff]
      %v285 = vld [vmem:[%s245 + $0x68] sm:$0xff]
      %v286 = vld [vmem:[%s245 + $0x70] sm:$0xff]
      %v287 = vld [vmem:[%s245 + $0x78] sm:$0xff]
      %v288 = vld [vmem:[%s245 + $0x80] sm:$0xff]
      %v289 = vld [vmem:[%s245 + $0x88] sm:$0xff]
      %v290 = vld [vmem:[%s245 + $0x90] sm:$0xff]
      %v291 = vld [vmem:[%s245 + $0x98] sm:$0xff]
      %v292 = vld [vmem:[%s245 + $0xa0] sm:$0xff]
      %v293 = vld [vmem:[%s245 + $0xa8] sm:$0xff]
      %v294 = vld [vmem:[%s245 + $0xb0] sm:$0xff]
      %v295 = vld [vmem:[%s245 + $0xb8] sm:$0xff]
      %v296 = vld [vmem:[%s245 + $0xc0] sm:$0xff]
      %v297 = vld [vmem:[%s245 + $0xc8] sm:$0xff]
      %v298 = vld [vmem:[%s245 + $0xd0] sm:$0xff]
      %v299 = vld [vmem:[%s245 + $0xd8] sm:$0xff]
      %v300 = vld [vmem:[%s245 + $0xe0] sm:$0xff]
      %v301 = vld [vmem:[%s245 + $0xe8] sm:$0xff]
      %v302 = vld [vmem:[%s245 + $0xf0] sm:$0xff]
      %v303 = vld [vmem:[%s245 + $0xf8] sm:$0xff]
      %v304 = vld [vmem:[#allocation2] sm:$0xff]
      %v305 = vld [vmem:[#allocation3] sm:$0xff]
      loop: start=0, step=1, limit=2
      $region33: #{bert_lstm_forward.1} parent=27 // loop_pre_header
        _
      $region34: #{bert_lstm_forward.1} parent=27 // loop_header
        %s307 = sphi 0, %s311
        %p308 = scmp.ge.s32.totalorder %s307, 2
        %v312 = vphi %v304, %v1019
        %v313 = vphi %v305, %v1017
      $region35: #{bert_lstm_forward.1} parent=27 // loop_header_branch
        %310 = sbr.rel (%p308) target = $region39
      $region36: #{bert_lstm_forward.1} parent=27 // loop_body
        %s314 = smul.u32 %s307, 4
        %s315 = ssub.s32 1, %s17
        %s316 = smul.u32 %s315, %s314
        %s317 = ssub.s32 7, %s314
        %s318 = smul.u32 %s17, %s317
        %s319 = sadd.s32 %s316, %s318
        %s320 = smul.u32 %s319, 4
        %s321 = smul.addr %s320, 4
        %s322 = scalar_lea.vmem %s234, %s321
        %v323 = vld [vmem:[%s322] sm:$0xff]
        %v324 = vld [vmem:[%s322 + $0x8] sm:$0xff]
        %v325 = vunpack.c.l.bf16 %v323
        %v326 = vunpack.c.h.bf16 %v323
        %v327 = vunpack.c.l.bf16 %v324
        %v328 = vunpack.c.h.bf16 %v324
        %v329 = vpack.c.bf16 %v312, %v312
        %v362 = vunpack.c.l.b16 %v272
        %v363 = vunpack.c.h.b16 %v272
        %v364 = vunpack.c.l.b16 %v273
        %v365 = vunpack.c.h.b16 %v273
        %v366 = vunpack.c.l.b16 %v274
        %v367 = vunpack.c.h.b16 %v274
        %v368 = vunpack.c.l.b16 %v275
        %v369 = vunpack.c.h.b16 %v275
        %v370 = vunpack.c.l.b16 %v276
        %v371 = vunpack.c.h.b16 %v276
        %v372 = vunpack.c.l.b16 %v277
        %v373 = vunpack.c.h.b16 %v277
        %v374 = vunpack.c.l.b16 %v278
        %v375 = vunpack.c.h.b16 %v278
        %v376 = vunpack.c.l.b16 %v279
        %v377 = vunpack.c.h.b16 %v279
        %v378 = vunpack.c.l.b16 %v280
        %v379 = vunpack.c.h.b16 %v280
        %v380 = vunpack.c.l.b16 %v281
        %v381 = vunpack.c.h.b16 %v281
        %v382 = vunpack.c.l.b16 %v282
        %v383 = vunpack.c.h.b16 %v282
        %v384 = vunpack.c.l.b16 %v283
        %v385 = vunpack.c.h.b16 %v283
        %v386 = vunpack.c.l.b16 %v284
        %v387 = vunpack.c.h.b16 %v284
        %v388 = vunpack.c.l.b16 %v285
        %v389 = vunpack.c.h.b16 %v285
        %v390 = vunpack.c.l.b16 %v286
        %v391 = vunpack.c.h.b16 %v286
        %v392 = vunpack.c.l.b16 %v287
        %v393 = vunpack.c.h.b16 %v287
        %v394 = vunpack.c.l.b16 %v288
        %v395 = vunpack.c.h.b16 %v288
        %v396 = vunpack.c.l.b16 %v289
        %v397 = vunpack.c.h.b16 %v289
        %v398 = vunpack.c.l.b16 %v290
        %v399 = vunpack.c.h.b16 %v290
        %v400 = vunpack.c.l.b16 %v291
        %v401 = vunpack.c.h.b16 %v291
        %v402 = vunpack.c.l.b16 %v292
        %v403 = vunpack.c.h.b16 %v292
        %v404 = vunpack.c.l.b16 %v293
        %v405 = vunpack.c.h.b16 %v293
        %v406 = vunpack.c.l.b16 %v294
        %v407 = vunpack.c.h.b16 %v294
        %v408 = vunpack.c.l.b16 %v295
        %v409 = vunpack.c.h.b16 %v295
        %v410 = vunpack.c.l.b16 %v296
        %v411 = vunpack.c.h.b16 %v296
        %v412 = vunpack.c.l.b16 %v297
        %v413 = vunpack.c.h.b16 %v297
        %v414 = vunpack.c.l.b16 %v298
        %v415 = vunpack.c.h.b16 %v298
        %v416 = vunpack.c.l.b16 %v299
        %v417 = vunpack.c.h.b16 %v299
        %v418 = vunpack.c.l.b16 %v300
        %v419 = vunpack.c.h.b16 %v300
        %v420 = vunpack.c.l.b16 %v301
        %v421 = vunpack.c.h.b16 %v301
        %v422 = vunpack.c.l.b16 %v302
        %v423 = vunpack.c.h.b16 %v302
        %v424 = vunpack.c.l.b16 %v303
        %v425 = vunpack.c.h.b16 %v303
        %v426 = vpack.c.b16 %v366, %v362
        %v427 = vpack.c.b16 %v367, %v363
        %v428 = vpack.c.b16 %v368, %v364
        %v429 = vpack.c.b16 %v369, %v365
        %v430 = vpack.c.b16 %v374, %v370
        %v431 = vpack.c.b16 %v375, %v371
        %v432 = vpack.c.b16 %v376, %v372
        %v433 = vpack.c.b16 %v377, %v373
        %v434 = vpack.c.b16 %v382, %v378
        %v435 = vpack.c.b16 %v383, %v379
        %v436 = vpack.c.b16 %v384, %v380
        %v437 = vpack.c.b16 %v385, %v381
        %v438 = vpack.c.b16 %v390, %v386
        %v439 = vpack.c.b16 %v391, %v387
        %v440 = vpack.c.b16 %v392, %v388
        %v441 = vpack.c.b16 %v393, %v389
        %v442 = vpack.c.b16 %v398, %v394
        %v443 = vpack.c.b16 %v399, %v395
        %v444 = vpack.c.b16 %v400, %v396
        %v445 = vpack.c.b16 %v401, %v397
        %v446 = vpack.c.b16 %v406, %v402
        %v447 = vpack.c.b16 %v407, %v403
        %v448 = vpack.c.b16 %v408, %v404
        %v449 = vpack.c.b16 %v409, %v405
        %v450 = vpack.c.b16 %v414, %v410
        %v451 = vpack.c.b16 %v415, %v411
        %v452 = vpack.c.b16 %v416, %v412
        %v453 = vpack.c.b16 %v417, %v413
        %v454 = vpack.c.b16 %v422, %v418
        %v455 = vpack.c.b16 %v423, %v419
        %v456 = vpack.c.b16 %v424, %v420
        %v457 = vpack.c.b16 %v425, %v421
        %490 = vmatpush.bf16.msra.mxu0 %v454
        %491 = vmatpush.bf16.msra.mxu0 %v450
        %492 = vmatpush.bf16.msra.mxu0 %v446
        %493 = vmatpush.bf16.msra.mxu0 %v442
        %494 = vmatpush.bf16.msra.mxu0 %v438
        %495 = vmatpush.bf16.msra.mxu0 %v434
        %496 = vmatpush.bf16.msra.mxu0 %v430
        %497 = vmatpush.bf16.msra.mxu0 %v426
        %498 = vmatmul.bf16.gmra.mxu0 %v329
        %v499 = vpop.f32.mrf.mxu0
        %v500 = vadd.f32 0.0, %v499
        %v501 = vpop.f32.mrf.mxu0
        %502 = vdwg.mxu0
        %503 = vmatpush.bf16.msra.mxu0 %v455
        %504 = vmatpush.bf16.msra.mxu0 %v451
        %505 = vmatpush.bf16.msra.mxu0 %v447
        %506 = vmatpush.bf16.msra.mxu0 %v443
        %507 = vmatpush.bf16.msra.mxu0 %v439
        %508 = vmatpush.bf16.msra.mxu0 %v435
        %509 = vmatpush.bf16.msra.mxu0 %v431
        %510 = vmatpush.bf16.msra.mxu0 %v427
        %511 = vmatmul.bf16.gmra.mxu0 %v329
        %v512 = vpop.f32.mrf.mxu0
        %v513 = vadd.f32 0.0, %v512
        %v514 = vpop.f32.mrf.mxu0
        %515 = vdwg.mxu0
        %516 = vmatpush.bf16.msra.mxu0 %v456
        %517 = vmatpush.bf16.msra.mxu0 %v452
        %518 = vmatpush.bf16.msra.mxu0 %v448
        %519 = vmatpush.bf16.msra.mxu0 %v444
        %520 = vmatpush.bf16.msra.mxu0 %v440
        %521 = vmatpush.bf16.msra.mxu0 %v436
        %522 = vmatpush.bf16.msra.mxu0 %v432
        %523 = vmatpush.bf16.msra.mxu0 %v428
        %524 = vmatmul.bf16.gmra.mxu0 %v329
        %v525 = vpop.f32.mrf.mxu0
        %v526 = vadd.f32 0.0, %v525
        %v527 = vpop.f32.mrf.mxu0
        %528 = vdwg.mxu0
        %529 = vmatpush.bf16.msra.mxu0 %v457
        %530 = vmatpush.bf16.msra.mxu0 %v453
        %531 = vmatpush.bf16.msra.mxu0 %v449
        %532 = vmatpush.bf16.msra.mxu0 %v445
        %533 = vmatpush.bf16.msra.mxu0 %v441
        %534 = vmatpush.bf16.msra.mxu0 %v437
        %535 = vmatpush.bf16.msra.mxu0 %v433
        %536 = vmatpush.bf16.msra.mxu0 %v429
        %537 = vmatmul.bf16.gmra.mxu0 %v329
        %v538 = vpop.f32.mrf.mxu0
        %v539 = vadd.f32 0.0, %v538
        %v540 = vpop.f32.mrf.mxu0
        %541 = vdwg.mxu0
        %v542 = vadd.f32 %v325, %v500
        %v543 = vadd.f32 %v326, %v513
        %v544 = vadd.f32 %v327, %v526
        %v545 = vadd.f32 %v328, %v539
        %v546 = vxor.u32 %v542, 2147483648
        %v547 = vmul.f32 %v546, 1.442695
        %v548 = vpow.pop %v547
        %v549 = vadd.f32 %v548, 1.0
        %v550 = vrcp.pop %v549
        %v551 = vmul.f32 %v549, %v550
        %v552 = vsub.f32 1.0, %v551
        %v553 = vmul.f32 %v550, %v552
        %v554 = vadd.f32 %v550, %v553
        %vm555 = vweird.f32 %v549
        %vm556 = vweird.f32 %v550
        %vm557 = vmor %vm555, %vm556
        %v558 = vsel %vm557, %v550, %v554
        %v559 = vand.u32 2147483647, %v549
        %vm560 = vcmp.eq.f32.partialorder %v559, 8.507059e+37
        %v561 = vand.u32 %v549, 2147483648
        %v562 = vor.u32 1.1754944e-38, %v561
        %v563 = vsel %vm560, %v562, %v558
        %v564 = vmul.f32 1.0, %v563
        %v565 = vxor.u32 %v543, 2147483648
        %v566 = vmul.f32 %v565, 1.442695
        %v567 = vpow.pop %v566
        %v568 = vadd.f32 %v567, 1.0
        %v569 = vrcp.pop %v568
        %v570 = vmul.f32 %v568, %v569
        %v571 = vsub.f32 1.0, %v570
        %v572 = vmul.f32 %v569, %v571
        %v573 = vadd.f32 %v569, %v572
        %vm574 = vweird.f32 %v568
        %vm575 = vweird.f32 %v569
        %vm576 = vmor %vm574, %vm575
        %v577 = vsel %vm576, %v569, %v573
        %v578 = vand.u32 2147483647, %v568
        %vm579 = vcmp.eq.f32.partialorder %v578, 8.507059e+37
        %v580 = vand.u32 %v568, 2147483648
        %v581 = vor.u32 1.1754944e-38, %v580
        %v582 = vsel %vm579, %v581, %v577
        %v583 = vmul.f32 1.0, %v582
        %v584 = vtanh.pop %v544
        %v585 = vxor.u32 %v545, 2147483648
        %v586 = vmul.f32 %v585, 1.442695
        %v587 = vpow.pop %v586
        %v588 = vadd.f32 %v587, 1.0
        %v589 = vrcp.pop %v588
        %v590 = vmul.f32 %v588, %v589
        %v591 = vsub.f32 1.0, %v590
        %v592 = vmul.f32 %v589, %v591
        %v593 = vadd.f32 %v589, %v592
        %vm594 = vweird.f32 %v588
        %vm595 = vweird.f32 %v589
        %vm596 = vmor %vm594, %vm595
        %v597 = vsel %vm596, %v589, %v593
        %v598 = vand.u32 2147483647, %v588
        %vm599 = vcmp.eq.f32.partialorder %v598, 8.507059e+37
        %v600 = vand.u32 %v588, 2147483648
        %v601 = vor.u32 1.1754944e-38, %v600
        %v602 = vsel %vm599, %v601, %v597
        %v603 = vmul.f32 1.0, %v602
        %v604 = vmul.f32 %v583, %v313
        %v605 = vmul.f32 %v564, %v584
        %v606 = vadd.f32 %v604, %v605
        %v607 = vtanh.pop %v606
        %v608 = vmul.f32 %v603, %v607
        %s609 = smul.u32 %s319, 8
        %s610 = scalar_lea.vmem %s259, %s609
        %611 = vst [vmem:[%s610] sm:$0xff] %v608
        %s612 = sadd.s32 %s314, 1
        %s613 = smul.u32 %s315, %s612
        %s614 = ssub.s32 6, %s314
        %s615 = smul.u32 %s17, %s614
        %s616 = sadd.s32 %s613, %s615
        %s617 = smul.u32 %s616, 4
        %s618 = smul.addr %s617, 4
        %s619 = scalar_lea.vmem %s234, %s618
        %v620 = vld [vmem:[%s619] sm:$0xff]
        %v621 = vld [vmem:[%s619 + $0x8] sm:$0xff]
        %v622 = vunpack.c.l.bf16 %v620
        %v623 = vunpack.c.h.bf16 %v620
        %v624 = vunpack.c.l.bf16 %v621
        %v625 = vunpack.c.h.bf16 %v621
        %v626 = vpack.c.bf16 %v608, %v608
        %627 = vmatpush.bf16.msra.mxu0 %v454
        %628 = vmatpush.bf16.msra.mxu0 %v450
        %629 = vmatpush.bf16.msra.mxu0 %v446
        %630 = vmatpush.bf16.msra.mxu0 %v442
        %631 = vmatpush.bf16.msra.mxu0 %v438
        %632 = vmatpush.bf16.msra.mxu0 %v434
        %633 = vmatpush.bf16.msra.mxu0 %v430
        %634 = vmatpush.bf16.msra.mxu0 %v426
        %635 = vmatmul.bf16.gmra.mxu0 %v626
        %v636 = vpop.f32.mrf.mxu0
        %v637 = vadd.f32 0.0, %v636
        %v638 = vpop.f32.mrf.mxu0
        %639 = vdwg.mxu0
        %640 = vmatpush.bf16.msra.mxu0 %v455
        %641 = vmatpush.bf16.msra.mxu0 %v451
        %642 = vmatpush.bf16.msra.mxu0 %v447
        %643 = vmatpush.bf16.msra.mxu0 %v443
        %644 = vmatpush.bf16.msra.mxu0 %v439
        %645 = vmatpush.bf16.msra.mxu0 %v435
        %646 = vmatpush.bf16.msra.mxu0 %v431
        %647 = vmatpush.bf16.msra.mxu0 %v427
        %648 = vmatmul.bf16.gmra.mxu0 %v626
        %v649 = vpop.f32.mrf.mxu0
        %v650 = vadd.f32 0.0, %v649
        %v651 = vpop.f32.mrf.mxu0
        %652 = vdwg.mxu0
        %653 = vmatpush.bf16.msra.mxu0 %v456
        %654 = vmatpush.bf16.msra.mxu0 %v452
        %655 = vmatpush.bf16.msra.mxu0 %v448
        %656 = vmatpush.bf16.msra.mxu0 %v444
        %657 = vmatpush.bf16.msra.mxu0 %v440
        %658 = vmatpush.bf16.msra.mxu0 %v436
        %659 = vmatpush.bf16.msra.mxu0 %v432
        %660 = vmatpush.bf16.msra.mxu0 %v428
        %661 = vmatmul.bf16.gmra.mxu0 %v626
        %v662 = vpop.f32.mrf.mxu0
        %v663 = vadd.f32 0.0, %v662
        %v664 = vpop.f32.mrf.mxu0
        %665 = vdwg.mxu0
        %666 = vmatpush.bf16.msra.mxu0 %v457
        %667 = vmatpush.bf16.msra.mxu0 %v453
        %668 = vmatpush.bf16.msra.mxu0 %v449
        %669 = vmatpush.bf16.msra.mxu0 %v445
        %670 = vmatpush.bf16.msra.mxu0 %v441
        %671 = vmatpush.bf16.msra.mxu0 %v437
        %672 = vmatpush.bf16.msra.mxu0 %v433
        %673 = vmatpush.bf16.msra.mxu0 %v429
        %674 = vmatmul.bf16.gmra.mxu0 %v626
        %v675 = vpop.f32.mrf.mxu0
        %v676 = vadd.f32 0.0, %v675
        %v677 = vpop.f32.mrf.mxu0
        %678 = vdwg.mxu0
        %v679 = vadd.f32 %v622, %v637
        %v680 = vadd.f32 %v623, %v650
        %v681 = vadd.f32 %v624, %v663
        %v682 = vadd.f32 %v625, %v676
        %v683 = vxor.u32 %v679, 2147483648
        %v684 = vmul.f32 %v683, 1.442695
        %v685 = vpow.pop %v684
        %v686 = vadd.f32 %v685, 1.0
        %v687 = vrcp.pop %v686
        %v688 = vmul.f32 %v686, %v687
        %v689 = vsub.f32 1.0, %v688
        %v690 = vmul.f32 %v687, %v689
        %v691 = vadd.f32 %v687, %v690
        %vm692 = vweird.f32 %v686
        %vm693 = vweird.f32 %v687
        %vm694 = vmor %vm692, %vm693
        %v695 = vsel %vm694, %v687, %v691
        %v696 = vand.u32 2147483647, %v686
        %vm697 = vcmp.eq.f32.partialorder %v696, 8.507059e+37
        %v698 = vand.u32 %v686, 2147483648
        %v699 = vor.u32 1.1754944e-38, %v698
        %v700 = vsel %vm697, %v699, %v695
        %v701 = vmul.f32 1.0, %v700
        %v702 = vxor.u32 %v680, 2147483648
        %v703 = vmul.f32 %v702, 1.442695
        %v704 = vpow.pop %v703
        %v705 = vadd.f32 %v704, 1.0
        %v706 = vrcp.pop %v705
        %v707 = vmul.f32 %v705, %v706
        %v708 = vsub.f32 1.0, %v707
        %v709 = vmul.f32 %v706, %v708
        %v710 = vadd.f32 %v706, %v709
        %vm711 = vweird.f32 %v705
        %vm712 = vweird.f32 %v706
        %vm713 = vmor %vm711, %vm712
        %v714 = vsel %vm713, %v706, %v710
        %v715 = vand.u32 2147483647, %v705
        %vm716 = vcmp.eq.f32.partialorder %v715, 8.507059e+37
        %v717 = vand.u32 %v705, 2147483648
        %v718 = vor.u32 1.1754944e-38, %v717
        %v719 = vsel %vm716, %v718, %v714
        %v720 = vmul.f32 1.0, %v719
        %v721 = vtanh.pop %v681
        %v722 = vxor.u32 %v682, 2147483648
        %v723 = vmul.f32 %v722, 1.442695
        %v724 = vpow.pop %v723
        %v725 = vadd.f32 %v724, 1.0
        %v726 = vrcp.pop %v725
        %v727 = vmul.f32 %v725, %v726
        %v728 = vsub.f32 1.0, %v727
        %v729 = vmul.f32 %v726, %v728
        %v730 = vadd.f32 %v726, %v729
        %vm731 = vweird.f32 %v725
        %vm732 = vweird.f32 %v726
        %vm733 = vmor %vm731, %vm732
        %v734 = vsel %vm733, %v726, %v730
        %v735 = vand.u32 2147483647, %v725
        %vm736 = vcmp.eq.f32.partialorder %v735, 8.507059e+37
        %v737 = vand.u32 %v725, 2147483648
        %v738 = vor.u32 1.1754944e-38, %v737
        %v739 = vsel %vm736, %v738, %v734
        %v740 = vmul.f32 1.0, %v739
        %v741 = vmul.f32 %v720, %v606
        %v742 = vmul.f32 %v701, %v721
        %v743 = vadd.f32 %v741, %v742
        %v744 = vtanh.pop %v743
        %v745 = vmul.f32 %v740, %v744
        %s746 = smul.u32 %s616, 8
        %s747 = scalar_lea.vmem %s259, %s746
        %748 = vst [vmem:[%s747] sm:$0xff] %v745
        %s749 = sadd.s32 %s314, 2
        %s750 = smul.u32 %s315, %s749
        %s751 = ssub.s32 5, %s314
        %s752 = smul.u32 %s17, %s751
        %s753 = sadd.s32 %s750, %s752
        %s754 = smul.u32 %s753, 4
        %s755 = smul.addr %s754, 4
        %s756 = scalar_lea.vmem %s234, %s755
        %v757 = vld [vmem:[%s756] sm:$0xff]
        %v758 = vld [vmem:[%s756 + $0x8] sm:$0xff]
        %v759 = vunpack.c.l.bf16 %v757
        %v760 = vunpack.c.h.bf16 %v757
        %v761 = vunpack.c.l.bf16 %v758
        %v762 = vunpack.c.h.bf16 %v758
        %v763 = vpack.c.bf16 %v745, %v745
        %764 = vmatpush.bf16.msra.mxu0 %v454
        %765 = vmatpush.bf16.msra.mxu0 %v450
        %766 = vmatpush.bf16.msra.mxu0 %v446
        %767 = vmatpush.bf16.msra.mxu0 %v442
        %768 = vmatpush.bf16.msra.mxu0 %v438
        %769 = vmatpush.bf16.msra.mxu0 %v434
        %770 = vmatpush.bf16.msra.mxu0 %v430
        %771 = vmatpush.bf16.msra.mxu0 %v426
        %772 = vmatmul.bf16.gmra.mxu0 %v763
        %v773 = vpop.f32.mrf.mxu0
        %v774 = vadd.f32 0.0, %v773
        %v775 = vpop.f32.mrf.mxu0
        %776 = vdwg.mxu0
        %777 = vmatpush.bf16.msra.mxu0 %v455
        %778 = vmatpush.bf16.msra.mxu0 %v451
        %779 = vmatpush.bf16.msra.mxu0 %v447
        %780 = vmatpush.bf16.msra.mxu0 %v443
        %781 = vmatpush.bf16.msra.mxu0 %v439
        %782 = vmatpush.bf16.msra.mxu0 %v435
        %783 = vmatpush.bf16.msra.mxu0 %v431
        %784 = vmatpush.bf16.msra.mxu0 %v427
        %785 = vmatmul.bf16.gmra.mxu0 %v763
        %v786 = vpop.f32.mrf.mxu0
        %v787 = vadd.f32 0.0, %v786
        %v788 = vpop.f32.mrf.mxu0
        %789 = vdwg.mxu0
        %790 = vmatpush.bf16.msra.mxu0 %v456
        %791 = vmatpush.bf16.msra.mxu0 %v452
        %792 = vmatpush.bf16.msra.mxu0 %v448
        %793 = vmatpush.bf16.msra.mxu0 %v444
        %794 = vmatpush.bf16.msra.mxu0 %v440
        %795 = vmatpush.bf16.msra.mxu0 %v436
        %796 = vmatpush.bf16.msra.mxu0 %v432
        %797 = vmatpush.bf16.msra.mxu0 %v428
        %798 = vmatmul.bf16.gmra.mxu0 %v763
        %v799 = vpop.f32.mrf.mxu0
        %v800 = vadd.f32 0.0, %v799
        %v801 = vpop.f32.mrf.mxu0
        %802 = vdwg.mxu0
        %803 = vmatpush.bf16.msra.mxu0 %v457
        %804 = vmatpush.bf16.msra.mxu0 %v453
        %805 = vmatpush.bf16.msra.mxu0 %v449
        %806 = vmatpush.bf16.msra.mxu0 %v445
        %807 = vmatpush.bf16.msra.mxu0 %v441
        %808 = vmatpush.bf16.msra.mxu0 %v437
        %809 = vmatpush.bf16.msra.mxu0 %v433
        %810 = vmatpush.bf16.msra.mxu0 %v429
        %811 = vmatmul.bf16.gmra.mxu0 %v763
        %v812 = vpop.f32.mrf.mxu0
        %v813 = vadd.f32 0.0, %v812
        %v814 = vpop.f32.mrf.mxu0
        %815 = vdwg.mxu0
        %v816 = vadd.f32 %v759, %v774
        %v817 = vadd.f32 %v760, %v787
        %v818 = vadd.f32 %v761, %v800
        %v819 = vadd.f32 %v762, %v813
        %v820 = vxor.u32 %v816, 2147483648
        %v821 = vmul.f32 %v820, 1.442695
        %v822 = vpow.pop %v821
        %v823 = vadd.f32 %v822, 1.0
        %v824 = vrcp.pop %v823
        %v825 = vmul.f32 %v823, %v824
        %v826 = vsub.f32 1.0, %v825
        %v827 = vmul.f32 %v824, %v826
        %v828 = vadd.f32 %v824, %v827
        %vm829 = vweird.f32 %v823
        %vm830 = vweird.f32 %v824
        %vm831 = vmor %vm829, %vm830
        %v832 = vsel %vm831, %v824, %v828
        %v833 = vand.u32 2147483647, %v823
        %vm834 = vcmp.eq.f32.partialorder %v833, 8.507059e+37
        %v835 = vand.u32 %v823, 2147483648
        %v836 = vor.u32 1.1754944e-38, %v835
        %v837 = vsel %vm834, %v836, %v832
        %v838 = vmul.f32 1.0, %v837
        %v839 = vxor.u32 %v817, 2147483648
        %v840 = vmul.f32 %v839, 1.442695
        %v841 = vpow.pop %v840
        %v842 = vadd.f32 %v841, 1.0
        %v843 = vrcp.pop %v842
        %v844 = vmul.f32 %v842, %v843
        %v845 = vsub.f32 1.0, %v844
        %v846 = vmul.f32 %v843, %v845
        %v847 = vadd.f32 %v843, %v846
        %vm848 = vweird.f32 %v842
        %vm849 = vweird.f32 %v843
        %vm850 = vmor %vm848, %vm849
        %v851 = vsel %vm850, %v843, %v847
        %v852 = vand.u32 2147483647, %v842
        %vm853 = vcmp.eq.f32.partialorder %v852, 8.507059e+37
        %v854 = vand.u32 %v842, 2147483648
        %v855 = vor.u32 1.1754944e-38, %v854
        %v856 = vsel %vm853, %v855, %v851
        %v857 = vmul.f32 1.0, %v856
        %v858 = vtanh.pop %v818
        %v859 = vxor.u32 %v819, 2147483648
        %v860 = vmul.f32 %v859, 1.442695
        %v861 = vpow.pop %v860
        %v862 = vadd.f32 %v861, 1.0
        %v863 = vrcp.pop %v862
        %v864 = vmul.f32 %v862, %v863
        %v865 = vsub.f32 1.0, %v864
        %v866 = vmul.f32 %v863, %v865
        %v867 = vadd.f32 %v863, %v866
        %vm868 = vweird.f32 %v862
        %vm869 = vweird.f32 %v863
        %vm870 = vmor %vm868, %vm869
        %v871 = vsel %vm870, %v863, %v867
        %v872 = vand.u32 2147483647, %v862
        %vm873 = vcmp.eq.f32.partialorder %v872, 8.507059e+37
        %v874 = vand.u32 %v862, 2147483648
        %v875 = vor.u32 1.1754944e-38, %v874
        %v876 = vsel %vm873, %v875, %v871
        %v877 = vmul.f32 1.0, %v876
        %v878 = vmul.f32 %v857, %v743
        %v879 = vmul.f32 %v838, %v858
        %v880 = vadd.f32 %v878, %v879
        %v881 = vtanh.pop %v880
        %v882 = vmul.f32 %v877, %v881
        %s883 = smul.u32 %s753, 8
        %s884 = scalar_lea.vmem %s259, %s883
        %885 = vst [vmem:[%s884] sm:$0xff] %v882
        %s886 = sadd.s32 %s314, 3
        %s887 = smul.u32 %s315, %s886
        %s888 = ssub.s32 4, %s314
        %s889 = smul.u32 %s17, %s888
        %s890 = sadd.s32 %s887, %s889
        %s891 = smul.u32 %s890, 4
        %s892 = smul.addr %s891, 4
        %s893 = scalar_lea.vmem %s234, %s892
        %v894 = vld [vmem:[%s893] sm:$0xff]
        %v895 = vld [vmem:[%s893 + $0x8] sm:$0xff]
        %v896 = vunpack.c.l.bf16 %v894
        %v897 = vunpack.c.h.bf16 %v894
        %v898 = vunpack.c.l.bf16 %v895
        %v899 = vunpack.c.h.bf16 %v895
        %v900 = vpack.c.bf16 %v882, %v882
        %901 = vmatpush.bf16.msra.mxu0 %v454
        %902 = vmatpush.bf16.msra.mxu0 %v450
        %903 = vmatpush.bf16.msra.mxu0 %v446
        %904 = vmatpush.bf16.msra.mxu0 %v442
        %905 = vmatpush.bf16.msra.mxu0 %v438
        %906 = vmatpush.bf16.msra.mxu0 %v434
        %907 = vmatpush.bf16.msra.mxu0 %v430
        %908 = vmatpush.bf16.msra.mxu0 %v426
        %909 = vmatmul.bf16.gmra.mxu0 %v900
        %v910 = vpop.f32.mrf.mxu0
        %v911 = vadd.f32 0.0, %v910
        %v912 = vpop.f32.mrf.mxu0
        %913 = vdwg.mxu0
        %914 = vmatpush.bf16.msra.mxu0 %v455
        %915 = vmatpush.bf16.msra.mxu0 %v451
        %916 = vmatpush.bf16.msra.mxu0 %v447
        %917 = vmatpush.bf16.msra.mxu0 %v443
        %918 = vmatpush.bf16.msra.mxu0 %v439
        %919 = vmatpush.bf16.msra.mxu0 %v435
        %920 = vmatpush.bf16.msra.mxu0 %v431
        %921 = vmatpush.bf16.msra.mxu0 %v427
        %922 = vmatmul.bf16.gmra.mxu0 %v900
        %v923 = vpop.f32.mrf.mxu0
        %v924 = vadd.f32 0.0, %v923
        %v925 = vpop.f32.mrf.mxu0
        %926 = vdwg.mxu0
        %927 = vmatpush.bf16.msra.mxu0 %v456
        %928 = vmatpush.bf16.msra.mxu0 %v452
        %929 = vmatpush.bf16.msra.mxu0 %v448
        %930 = vmatpush.bf16.msra.mxu0 %v444
        %931 = vmatpush.bf16.msra.mxu0 %v440
        %932 = vmatpush.bf16.msra.mxu0 %v436
        %933 = vmatpush.bf16.msra.mxu0 %v432
        %934 = vmatpush.bf16.msra.mxu0 %v428
        %935 = vmatmul.bf16.gmra.mxu0 %v900
        %v936 = vpop.f32.mrf.mxu0
        %v937 = vadd.f32 0.0, %v936
        %v938 = vpop.f32.mrf.mxu0
        %939 = vdwg.mxu0
        %940 = vmatpush.bf16.msra.mxu0 %v457
        %941 = vmatpush.bf16.msra.mxu0 %v453
        %942 = vmatpush.bf16.msra.mxu0 %v449
        %943 = vmatpush.bf16.msra.mxu0 %v445
        %944 = vmatpush.bf16.msra.mxu0 %v441
        %945 = vmatpush.bf16.msra.mxu0 %v437
        %946 = vmatpush.bf16.msra.mxu0 %v433
        %947 = vmatpush.bf16.msra.mxu0 %v429
        %948 = vmatmul.bf16.gmra.mxu0 %v900
        %v949 = vpop.f32.mrf.mxu0
        %v950 = vadd.f32 0.0, %v949
        %v951 = vpop.f32.mrf.mxu0
        %952 = vdwg.mxu0
        %v953 = vadd.f32 %v896, %v911
        %v954 = vadd.f32 %v897, %v924
        %v955 = vadd.f32 %v898, %v937
        %v956 = vadd.f32 %v899, %v950
        %v957 = vxor.u32 %v953, 2147483648
        %v958 = vmul.f32 %v957, 1.442695
        %v959 = vpow.pop %v958
        %v960 = vadd.f32 %v959, 1.0
        %v961 = vrcp.pop %v960
        %v962 = vmul.f32 %v960, %v961
        %v963 = vsub.f32 1.0, %v962
        %v964 = vmul.f32 %v961, %v963
        %v965 = vadd.f32 %v961, %v964
        %vm966 = vweird.f32 %v960
        %vm967 = vweird.f32 %v961
        %vm968 = vmor %vm966, %vm967
        %v969 = vsel %vm968, %v961, %v965
        %v970 = vand.u32 2147483647, %v960
        %vm971 = vcmp.eq.f32.partialorder %v970, 8.507059e+37
        %v972 = vand.u32 %v960, 2147483648
        %v973 = vor.u32 1.1754944e-38, %v972
        %v974 = vsel %vm971, %v973, %v969
        %v975 = vmul.f32 1.0, %v974
        %v976 = vxor.u32 %v954, 2147483648
        %v977 = vmul.f32 %v976, 1.442695
        %v978 = vpow.pop %v977
        %v979 = vadd.f32 %v978, 1.0
        %v980 = vrcp.pop %v979
        %v981 = vmul.f32 %v979, %v980
        %v982 = vsub.f32 1.0, %v981
        %v983 = vmul.f32 %v980, %v982
        %v984 = vadd.f32 %v980, %v983
        %vm985 = vweird.f32 %v979
        %vm986 = vweird.f32 %v980
        %vm987 = vmor %vm985, %vm986
        %v988 = vsel %vm987, %v980, %v984
        %v989 = vand.u32 2147483647, %v979
        %vm990 = vcmp.eq.f32.partialorder %v989, 8.507059e+37
        %v991 = vand.u32 %v979, 2147483648
        %v992 = vor.u32 1.1754944e-38, %v991
        %v993 = vsel %vm990, %v992, %v988
        %v994 = vmul.f32 1.0, %v993
        %v995 = vtanh.pop %v955
        %v996 = vxor.u32 %v956, 2147483648
        %v997 = vmul.f32 %v996, 1.442695
        %v998 = vpow.pop %v997
        %v999 = vadd.f32 %v998, 1.0
        %v1000 = vrcp.pop %v999
        %v1001 = vmul.f32 %v999, %v1000
        %v1002 = vsub.f32 1.0, %v1001
        %v1003 = vmul.f32 %v1000, %v1002
        %v1004 = vadd.f32 %v1000, %v1003
        %vm1005 = vweird.f32 %v999
        %vm1006 = vweird.f32 %v1000
        %vm1007 = vmor %vm1005, %vm1006
        %v1008 = vsel %vm1007, %v1000, %v1004
        %v1009 = vand.u32 2147483647, %v999
        %vm1010 = vcmp.eq.f32.partialorder %v1009, 8.507059e+37
        %v1011 = vand.u32 %v999, 2147483648
        %v1012 = vor.u32 1.1754944e-38, %v1011
        %v1013 = vsel %vm1010, %v1012, %v1008
        %v1014 = vmul.f32 1.0, %v1013
        %v1015 = vmul.f32 %v994, %v880
        %v1016 = vmul.f32 %v975, %v995
        %v1017 = vadd.f32 %v1015, %v1016
        %v1018 = vtanh.pop %v1017
        %v1019 = vmul.f32 %v1014, %v1018
        %s1020 = smul.u32 %s890, 8
        %s1021 = scalar_lea.vmem %s259, %s1020
        %1022 = vst [vmem:[%s1021] sm:$0xff] %v1019
      $region37: #{bert_lstm_forward.1} parent=27 // loop_footer
        %s311 = sadd.s32 1, %s307
      $region38: #{bert_lstm_forward.1} parent=27 // loop_footer_branch
        %306 = sbr.rel target = $region34
      $region39: #{bert_lstm_forward.1} parent=27 // loop_exit
        _
      %1023 = vst [vmem:[#allocation2] sm:$0xff] %v312
      %1024 = vst [vmem:[#allocation3] sm:$0xff] %v313
      %s1025 = ssub.s32 1, %s17
      %s1026 = smul.u32 %s1025, %s18
      %s1027 = ssub.s32 0, %s18
      %s1028 = smul.u32 %s17, %s1027
      %s1029 = sadd.s32 %s1026, %s1028
      %s1030 = smul.u32 8, %s1029
      %p1031 = scmp.lt.s32.totalorder %s17, 1
      %s1032 = scalar_select %p1031, %s17, 1
      %p1033 = scmp.lt.s32.totalorder %s1030, 7
      %s1034 = scalar_select %p1033, %s1030, 7
      %s1035 = smul.addr %s1032, 8
      %s1036 = sadd.s32 %s1034, %s1035
      %s1037 = smul.addr %s1036, 8
      %s1038 = scalar_lea.vmem %s2, %s1037
      // Predicated region
      $region40: #{bert_lstm_forward.1} parent=27 // pred_check
        %p1039 = pneg %p119
      $region41: #{bert_lstm_forward.1} parent=27 // pred_check_branch
        %1041 = sbr.rel (%p1039) target = $region43
      $region42: #{bert_lstm_forward.1} parent=27 // pred_region
        %s1042 = ssub.s32 1, %s17
        %s1043 = smul.u32 %s1042, %s18
        %s1044 = ssub.s32 0, %s18
        %s1045 = smul.u32 %s17, %s1044
        %s1046 = sadd.s32 %s1043, %s1045
        %s1047 = smul.u32 8, %s1046
      $region43: #{bert_lstm_forward.1} parent=27 // pred_fallthru
        _
    $region28: #{bert_lstm_forward.1} parent=5 // pred_fallthru
      _
    %p1048 = scmp.le.s32.totalorder 2, %s8
    // Predicated region
    $region44: #{bert_lstm_forward.1} parent=5 // pred_check
      %p1049 = pneg %p1048
    $region45: #{bert_lstm_forward.1} parent=5 // pred_check_branch
      %1051 = sbr.rel (%p1049) target = $region47
    $region46: #{bert_lstm_forward.1} parent=5 // pred_region
      %s1052 = ssub.s32 %s8, 2
      // Predicated region
      $region48: #{bert_lstm_forward.1} parent=46 // pred_check
        %p1053 = pneg %p125
      $region49: #{bert_lstm_forward.1} parent=46 // pred_check_branch
        %1055 = sbr.rel (%p1053) target = $region51
      $region50: #{bert_lstm_forward.1} parent=46 // pred_region
        %s1056 = ssub.s32 1, %s19
        %s1057 = smul.u32 %s1056, %s20
        %s1058 = ssub.s32 0, %s20
        %s1059 = smul.u32 %s19, %s1058
        %s1060 = sadd.s32 %s1057, %s1059
        %s1061 = smul.u32 8, %s1060
        %p1062 = scmp.lt.s32.totalorder %s19, 1
        %s1063 = scalar_select %p1062, %s19, 1
        %p1064 = scmp.lt.s32.totalorder %s1061, 7
        %s1065 = scalar_select %p1064, %s1061, 7
        %s1066 = smul.addr %s1063, 8
        %s1067 = sadd.s32 %s1065, %s1066
        %s1068 = smul.addr %s1067, 8
        %s1069 = scalar_lea.vmem %s2, %s1068
      $region51: #{bert_lstm_forward.1} parent=46 // pred_fallthru
        _
    $region47: #{bert_lstm_forward.1} parent=5 // pred_fallthru
      _
  $region6: #{bert_lstm_forward.1} parent=0 // loop_footer
    %s12 = sadd.s32 1, %s8
  $region7: #{bert_lstm_forward.1} parent=0 // loop_footer_branch
    %7 = sbr.rel target = $region3
  $region8: #{bert_lstm_forward.1} parent=0 // loop_exit
    _

</llo_original>
